<compile_context>
chip_gen: v5e
topology: v5e:2x2
jax: 0.10.0
libtpu: 0.0.40
codegen_flags: <defaults>
</compile_context>

<pallas_src>
import jax
import jax.numpy as jnp
from jax.experimental import pallas as pl
from jax.experimental.pallas import tpu as pltpu

BN_EPS = 1e-5


def _round_up16(n):
    # Sublane-aligned row offsets for both f32 (8) and packed bf16 (16) layouts.
    return (n + 15) // 16 * 16


def _bn_relu(h, gamma, beta):
    # Training-mode BatchNorm1d (biased variance) + ReLU, two-pass variance for
    # numerical stability; gamma folded into the rsqrt scale.  All f32 VPU math.
    m = jnp.mean(h, axis=0, keepdims=True)
    d = h - m
    v = jnp.mean(d * d, axis=0, keepdims=True)
    s = gamma * jax.lax.rsqrt(v + BN_EPS)
    return jnp.maximum(d * s + beta, 0.0)


def _make_kernel(dims, w_offsets):
    latent, in_xc, out_size, h1, h2, d1, d2 = dims
    o1, o2, oh, o3z, o4, o5 = w_offsets

    def mm(a, w):
        # MXU operands follow the (possibly bf16) weight dtype; f32 accumulation.
        return jnp.dot(a.astype(w.dtype), w, preferred_element_type=jnp.float32)

    def kernel(xs_ref, wslab_ref, vecs_ref, out_ref):
        # Single packed input slab: [x | c | eps | c@W3c]  (c-projection hoisted
        # to the wrapper since it does not depend on z).
        xs = xs_ref[...]
        xc = xs[:, :in_xc]
        eps = xs[:, in_xc:in_xc + latent]
        cproj = xs[:, in_xc + latent:in_xc + latent + d1]

        # Packed weight slab: static, sublane-aligned row offsets (no DMA per weight).
        w1 = wslab_ref[o1:o1 + in_xc, :h1]
        w2 = wslab_ref[o2:o2 + h1, :h2]
        wh = wslab_ref[oh:oh + h2, :2 * latent]
        w3z = wslab_ref[o3z:o3z + latent, :d1]
        w4 = wslab_ref[o4:o4 + d1, :d2]
        w5 = wslab_ref[o5:o5 + d2, :out_size]

        # Packed per-feature vectors (f32, one VMEM tile, static row slices).
        g1, be1 = vecs_ref[0:1, :h1], vecs_ref[1:2, :h1]
        g2, be2 = vecs_ref[2:3, :h2], vecs_ref[3:4, :h2]
        bh = vecs_ref[4:5, :2 * latent]
        g3, be3 = vecs_ref[5:6, :d1], vecs_ref[6:7, :d1]
        g4, be4 = vecs_ref[7:8, :d2], vecs_ref[8:9, :d2]
        b5 = vecs_ref[9:10, :out_size]

        # ---- encode ----  (fc1/fc2 biases dropped: cancelled by BN mean-sub)
        a1 = _bn_relu(mm(xc, w1), g1, be1)
        a2 = _bn_relu(mm(a1, w2), g2, be2)

        # Fused mu|logvar head.
        heads = mm(a2, wh) + bh
        mu = heads[:, :latent]
        logvar = heads[:, latent:]

        # ---- reparameterize ----  (f32 VPU/EUP math)
        z = mu + eps * jnp.exp(0.5 * logvar)

        # ---- decode ----  (fc3/fc4 biases dropped; c@W3c comes in precomputed)
        a3 = _bn_relu(mm(z, w3z) + cproj, g3, be3)
        a4 = _bn_relu(mm(a3, w4), g4, be4)
        recon = mm(a4, w5) + b5

        # ONE concatenated store: [recon | mu | logvar] (no masked sub-stores).
        out_ref[...] = jnp.concatenate([recon, mu, logvar], axis=-1)

    return kernel


def _pack_kernel_params(params, latent, use_bf16):
    """Repackage torch-style params into the kernel's fused/packed layout."""
    in_xc, h1 = params["w1"].shape
    h2 = params["w2"].shape[1]
    d1 = params["w3"].shape[1]
    d2 = params["w4"].shape[1]
    out_size = params["w5"].shape[1]

    wh = jnp.concatenate([params["w21"], params["w22"]], axis=1)   # (h2, 2*latent)
    bh = jnp.concatenate([params["b21"], params["b22"]], axis=1)   # (1, 2*latent)
    w3z = params["w3"][:latent]                                    # (latent, d1)
    w3c = params["w3"][latent:]                                    # (cond, d1), hoisted

    # ---- one padded weight slab, sublane-aligned row offsets ----
    weights = [params["w1"], params["w2"], wh, w3z, params["w4"], params["w5"]]
    maxw = max(w.shape[1] for w in weights)
    blocks, offsets, off = [], [], 0
    for w in weights:
        offsets.append(off)
        r_pad = _round_up16(w.shape[0]) - w.shape[0]
        blocks.append(jnp.pad(w, ((0, r_pad), (0, maxw - w.shape[1]))))
        off += _round_up16(w.shape[0])
    wslab = jnp.concatenate(blocks, axis=0)                        # (sum_rows, maxw)
    if use_bf16:
        wslab = wslab.astype(jnp.bfloat16)   # pre-cast in wrapper (halves DMA bytes)

    # ---- one packed per-feature-vector slab (stays f32) ----
    maxv = max(h1, h2, 2 * latent, d1, d2, out_size)

    def pad(v):
        return jnp.pad(v, ((0, 0), (0, maxv - v.shape[1])))

    vecs = jnp.concatenate([
        pad(params["g1"]), pad(params["be1"]),
        pad(params["g2"]), pad(params["be2"]),
        pad(bh),
        pad(params["g3"]), pad(params["be3"]),
        pad(params["g4"]), pad(params["be4"]),
        pad(params["b5"]),
    ], axis=0)                                                     # (10, maxv)

    dims = (latent, in_xc, out_size, h1, h2, d1, d2)
    return wslab, vecs, w3c, dims, tuple(offsets)


def cvae_forward(x, c, eps, params, *, use_bf16=True):
    """Full CVAE forward pass inside one Pallas kernel.

    x:   (B, input_size)      float32
    c:   (B, condition_size)  float32
    eps: (B, latent_size)     float32  (reparameterization noise)
    Returns (recon, mu, logvar), all float32.
    """
    B = x.shape[0]
    latent = params["w21"].shape[1]
    out_size = params["w5"].shape[1]

    wslab, vecs, w3c, dims, offsets = _pack_kernel_params(params, latent, use_bf16)

    # Hoist the conditioning projection (independent of z) and pack all
    # activation-side inputs into ONE slab -> one input DMA stream.
    cproj = jnp.dot(c, w3c)                                        # (B, d1), f32
    xs = jnp.concatenate([x, c, eps, cproj], axis=-1)

    kernel = _make_kernel(dims, offsets)
    vmem = pl.BlockSpec(memory_space=pltpu.MemorySpace.VMEM)

    # TODO(synk): for large B, pad/present a lane-dense (multiple-of-128) output
    # slab (or adopt the transposed layout with batch on the MXU lane dim).
    slab = pl.pallas_call(
        kernel,
        out_shape=jax.ShapeDtypeStruct((B, out_size + 2 * latent), jnp.float32),
        in_specs=[vmem, vmem, vmem],
        out_specs=vmem,
    )(xs, wslab, vecs)

    recon = slab[:, :out_size]
    mu = slab[:, out_size:out_size + latent]
    logvar = slab[:, out_size + latent:]
    return recon, mu, logvar


def make_params(key, input_size, condition_size, latent_size, output_size, hidden_sizes):
    """Deterministic synthetic torch-style parameters. Linear weights stored (in, out)."""
    h1 = hidden_sizes["encode_layer1"]
    h2 = hidden_sizes["encode_layer2"]
    d1 = hidden_sizes["decode_layer1"]
    d2 = hidden_sizes["decode_layer2"]
    keys = jax.random.split(key, 14)

    def lin(k, n_in, n_out):
        s = 1.0 / jnp.sqrt(n_in)
        return jax.random.uniform(k, (n_in, n_out), jnp.float32, -s, s)

    def bias(k, n_in, n_out):
        s = 1.0 / jnp.sqrt(n_in)
        return jax.random.uniform(k, (1, n_out), jnp.float32, -s, s)

    def ones(n):
        return jnp.ones((1, n), jnp.float32)

    def zeros(n):
        return jnp.zeros((1, n), jnp.float32)

    return {
        "w1": lin(keys[0], input_size + condition_size, h1),
        "b1": bias(keys[1], input_size + condition_size, h1),
        "g1": ones(h1), "be1": zeros(h1),

        "w2": lin(keys[2], h1, h2), "b2": bias(keys[3], h1, h2),
        "g2": ones(h2), "be2": zeros(h2),

        "w21": lin(keys[4], h2, latent_size), "b21": bias(keys[5], h2, latent_size),
        "w22": lin(keys[6], h2, latent_size), "b22": bias(keys[7], h2, latent_size),

        "w3": lin(keys[8], latent_size + condition_size, d1),
        "b3": bias(keys[9], latent_size + condition_size, d1),
        "g3": ones(d1), "be3": zeros(d1),

        "w4": lin(keys[10], d1, d2), "b4": bias(keys[11], d1, d2),
        "g4": ones(d2), "be4": zeros(d2),

        "w5": lin(keys[12], d2, output_size), "b5": bias(keys[13], d2, output_size),
    }


def cvae_reference(x, c, eps, p):
    """Pure-JAX reference with the original torch math (incl. pre-BN biases)."""
    def bn_relu(h, g, b):
        m = jnp.mean(h, axis=0, keepdims=True)
        v = jnp.mean((h - m) ** 2, axis=0, keepdims=True)
        return jnp.maximum((h - m) / jnp.sqrt(v + BN_EPS) * g + b, 0.0)

    xc = jnp.concatenate([x, c], axis=1)
    h1 = bn_relu(xc @ p["w1"] + p["b1"], p["g1"], p["be1"])
    h2 = bn_relu(h1 @ p["w2"] + p["b2"], p["g2"], p["be2"])
    mu = h2 @ p["w21"] + p["b21"]
    logvar = h2 @ p["w22"] + p["b22"]
    z = mu + eps * jnp.exp(0.5 * logvar)
    zc = jnp.concatenate([z, c], axis=1)
    h3 = bn_relu(zc @ p["w3"] + p["b3"], p["g3"], p["be3"])
    h4 = bn_relu(h3 @ p["w4"] + p["b4"], p["g4"], p["be4"])
    recon = h4 @ p["w5"] + p["b5"]
    return recon, mu, logvar


if __name__ == "__main__":
    # Small, forward-consistent shapes (B multiple of 8 sublanes; BN needs B > 1).
    B = 8
    input_size = 16
    condition_size = 4
    latent_size = 8
    output_size = 16
    hidden_sizes = {
        "encode_layer1": 32,
        "encode_layer2": 32,
        "decode_layer1": 32,
        "decode_layer2": 32,
    }

    key = jax.random.PRNGKey(0)
    k_par, k_x, k_c, k_eps = jax.random.split(key, 4)

    params = make_params(k_par, input_size, condition_size, latent_size,
                         output_size, hidden_sizes)
    x = jax.random.normal(k_x, (B, input_size), jnp.float32)
    c = jax.random.normal(k_c, (B, condition_size), jnp.float32)
    eps = jax.random.normal(k_eps, (B, latent_size), jnp.float32)

    r_ref, mu_ref, lv_ref = cvae_reference(x, c, eps, params)

    # f32 path: tight check against the pure-JAX (torch-semantics) reference.
    recon, mu, logvar = jax.block_until_ready(
        cvae_forward(x, c, eps, params, use_bf16=False))
    assert jnp.allclose(recon, r_ref, atol=1e-4, rtol=1e-4)
    assert jnp.allclose(mu, mu_ref, atol=1e-4, rtol=1e-4)
    assert jnp.allclose(logvar, lv_ref, atol=1e-4, rtol=1e-4)

    # Default bf16-MXU path: looser tolerance (bf16 operands, f32 accumulation).
    recon_b, mu_b, logvar_b = jax.block_until_ready(
        cvae_forward(x, c, eps, params, use_bf16=True))
    assert jnp.allclose(recon_b, r_ref, atol=5e-2, rtol=5e-2)
    assert jnp.allclose(mu_b, mu_ref, atol=5e-2, rtol=5e-2)
    assert jnp.allclose(logvar_b, lv_ref, atol=5e-2, rtol=5e-2)

    print("KERNEL_OK")
</pallas_src>

<mosaic_0001>
module attributes {stable_mosaic.version = 11 : i64} {
  func.func @kernel(%arg0: memref<8x60xf32, #tpu.memory_space<vmem>>, %arg1: memref<176x32xf32, #tpu.memory_space<vmem>>, %arg2: memref<10x32xf32, #tpu.memory_space<vmem>>, %arg3: memref<8x32xf32, #tpu.memory_space<vmem>>) attributes {dimension_semantics = [], scalar_prefetch = 0 : i64, scratch_operands = 0 : i64, tpu.core_type = #tpu.core_type<tc>} {
    %c0 = arith.constant 0 : index
    %c0_0 = arith.constant 0 : index
    %0 = vector.load %arg0[%c0, %c0_0] : memref<8x60xf32, #tpu.memory_space<vmem>>, vector<8x60xf32>
    %1 = vector.extract_strided_slice %0 {offsets = [0, 0], sizes = [8, 20], strides = [1, 1]} : vector<8x60xf32> to vector<8x20xf32>
    %2 = vector.extract_strided_slice %0 {offsets = [0, 20], sizes = [8, 8], strides = [1, 1]} : vector<8x60xf32> to vector<8x8xf32>
    %3 = vector.extract_strided_slice %0 {offsets = [0, 28], sizes = [8, 32], strides = [1, 1]} : vector<8x60xf32> to vector<8x32xf32>
    %c0_1 = arith.constant 0 : index
    %c0_2 = arith.constant 0 : index
    %4 = vector.load %arg1[%c0_1, %c0_2] : memref<176x32xf32, #tpu.memory_space<vmem>>, vector<20x32xf32>
    %c32 = arith.constant 32 : index
    %c0_3 = arith.constant 0 : index
    %5 = vector.load %arg1[%c32, %c0_3] : memref<176x32xf32, #tpu.memory_space<vmem>>, vector<32x32xf32>
    %c64 = arith.constant 64 : index
    %c0_4 = arith.constant 0 : index
    %6 = vector.load %arg1[%c64, %c0_4] : memref<176x32xf32, #tpu.memory_space<vmem>>, vector<32x16xf32>
    %c96 = arith.constant 96 : index
    %c0_5 = arith.constant 0 : index
    %7 = vector.load %arg1[%c96, %c0_5] : memref<176x32xf32, #tpu.memory_space<vmem>>, vector<8x32xf32>
    %c112 = arith.constant 112 : index
    %c0_6 = arith.constant 0 : index
    %8 = vector.load %arg1[%c112, %c0_6] : memref<176x32xf32, #tpu.memory_space<vmem>>, vector<32x32xf32>
    %c144 = arith.constant 144 : index
    %c0_7 = arith.constant 0 : index
    %9 = vector.load %arg1[%c144, %c0_7] : memref<176x32xf32, #tpu.memory_space<vmem>>, vector<32x16xf32>
    %c0_8 = arith.constant 0 : index
    %c0_9 = arith.constant 0 : index
    %10 = vector.load %arg2[%c0_8, %c0_9] : memref<10x32xf32, #tpu.memory_space<vmem>>, vector<1x32xf32>
    %c1 = arith.constant 1 : index
    %c0_10 = arith.constant 0 : index
    %11 = vector.load %arg2[%c1, %c0_10] : memref<10x32xf32, #tpu.memory_space<vmem>>, vector<1x32xf32>
    %c2 = arith.constant 2 : index
    %c0_11 = arith.constant 0 : index
    %12 = vector.load %arg2[%c2, %c0_11] : memref<10x32xf32, #tpu.memory_space<vmem>>, vector<1x32xf32>
    %c3 = arith.constant 3 : index
    %c0_12 = arith.constant 0 : index
    %13 = vector.load %arg2[%c3, %c0_12] : memref<10x32xf32, #tpu.memory_space<vmem>>, vector<1x32xf32>
    %c4 = arith.constant 4 : index
    %c0_13 = arith.constant 0 : index
    %14 = vector.load %arg2[%c4, %c0_13] : memref<10x32xf32, #tpu.memory_space<vmem>>, vector<1x16xf32>
    %c5 = arith.constant 5 : index
    %c0_14 = arith.constant 0 : index
    %15 = vector.load %arg2[%c5, %c0_14] : memref<10x32xf32, #tpu.memory_space<vmem>>, vector<1x32xf32>
    %c6 = arith.constant 6 : index
    %c0_15 = arith.constant 0 : index
    %16 = vector.load %arg2[%c6, %c0_15] : memref<10x32xf32, #tpu.memory_space<vmem>>, vector<1x32xf32>
    %c7 = arith.constant 7 : index
    %c0_16 = arith.constant 0 : index
    %17 = vector.load %arg2[%c7, %c0_16] : memref<10x32xf32, #tpu.memory_space<vmem>>, vector<1x32xf32>
    %c8 = arith.constant 8 : index
    %c0_17 = arith.constant 0 : index
    %18 = vector.load %arg2[%c8, %c0_17] : memref<10x32xf32, #tpu.memory_space<vmem>>, vector<1x32xf32>
    %c9 = arith.constant 9 : index
    %c0_18 = arith.constant 0 : index
    %19 = vector.load %arg2[%c9, %c0_18] : memref<10x32xf32, #tpu.memory_space<vmem>>, vector<1x16xf32>
    %cst = arith.constant dense<0.000000e+00> : vector<8x32xf32>
    %20 = tpu.matmul %1, %4, %cst {dimension_numbers = #tpu.dot_dimension_numbers<[1], [0], [0], [1], [0, 0, 1, 1], [], []>} : vector<8x20xf32>, vector<20x32xf32>, vector<8x32xf32> -> vector<8x32xf32>
    %cst_19 = arith.constant dense<0.000000e+00> : vector<32xf32>
    %21 = vector.multi_reduction <add>, %20, %cst_19 [0] : vector<8x32xf32> to vector<32xf32>
    %22 = vector.shape_cast %21 : vector<32xf32> to vector<1x32xf32>
    %cst_20 = arith.constant 8.000000e+00 : f32
    %23 = vector.broadcast %cst_20 : f32 to vector<1x32xf32>
    %24 = arith.divf %22, %23 : vector<1x32xf32>
    %25 = vector.broadcast %24 : vector<1x32xf32> to vector<8x32xf32>
    %26 = arith.subf %20, %25 : vector<8x32xf32>
    %27 = arith.mulf %26, %26 : vector<8x32xf32>
    %cst_21 = arith.constant dense<0.000000e+00> : vector<32xf32>
    %28 = vector.multi_reduction <add>, %27, %cst_21 [0] : vector<8x32xf32> to vector<32xf32>
    %29 = vector.shape_cast %28 : vector<32xf32> to vector<1x32xf32>
    %cst_22 = arith.constant 8.000000e+00 : f32
    %30 = vector.broadcast %cst_22 : f32 to vector<1x32xf32>
    %31 = arith.divf %29, %30 : vector<1x32xf32>
    %cst_23 = arith.constant 9.99999974E-6 : f32
    %32 = vector.broadcast %cst_23 : f32 to vector<1x32xf32>
    %33 = arith.addf %31, %32 : vector<1x32xf32>
    %34 = math.rsqrt %33 : vector<1x32xf32>
    %35 = arith.mulf %10, %34 : vector<1x32xf32>
    %36 = vector.broadcast %35 : vector<1x32xf32> to vector<8x32xf32>
    %37 = arith.mulf %26, %36 : vector<8x32xf32>
    %38 = vector.broadcast %11 : vector<1x32xf32> to vector<8x32xf32>
    %39 = arith.addf %37, %38 : vector<8x32xf32>
    %cst_24 = arith.constant 0.000000e+00 : f32
    %40 = vector.broadcast %cst_24 : f32 to vector<8x32xf32>
    %41 = arith.maximumf %39, %40 : vector<8x32xf32>
    %cst_25 = arith.constant dense<0.000000e+00> : vector<8x32xf32>
    %42 = tpu.matmul %41, %5, %cst_25 {dimension_numbers = #tpu.dot_dimension_numbers<[1], [0], [0], [1], [0, 0, 1, 1], [], []>} : vector<8x32xf32>, vector<32x32xf32>, vector<8x32xf32> -> vector<8x32xf32>
    %cst_26 = arith.constant dense<0.000000e+00> : vector<32xf32>
    %43 = vector.multi_reduction <add>, %42, %cst_26 [0] : vector<8x32xf32> to vector<32xf32>
    %44 = vector.shape_cast %43 : vector<32xf32> to vector<1x32xf32>
    %cst_27 = arith.constant 8.000000e+00 : f32
    %45 = vector.broadcast %cst_27 : f32 to vector<1x32xf32>
    %46 = arith.divf %44, %45 : vector<1x32xf32>
    %47 = vector.broadcast %46 : vector<1x32xf32> to vector<8x32xf32>
    %48 = arith.subf %42, %47 : vector<8x32xf32>
    %49 = arith.mulf %48, %48 : vector<8x32xf32>
    %cst_28 = arith.constant dense<0.000000e+00> : vector<32xf32>
    %50 = vector.multi_reduction <add>, %49, %cst_28 [0] : vector<8x32xf32> to vector<32xf32>
    %51 = vector.shape_cast %50 : vector<32xf32> to vector<1x32xf32>
    %cst_29 = arith.constant 8.000000e+00 : f32
    %52 = vector.broadcast %cst_29 : f32 to vector<1x32xf32>
    %53 = arith.divf %51, %52 : vector<1x32xf32>
    %cst_30 = arith.constant 9.99999974E-6 : f32
    %54 = vector.broadcast %cst_30 : f32 to vector<1x32xf32>
    %55 = arith.addf %53, %54 : vector<1x32xf32>
    %56 = math.rsqrt %55 : vector<1x32xf32>
    %57 = arith.mulf %12, %56 : vector<1x32xf32>
    %58 = vector.broadcast %57 : vector<1x32xf32> to vector<8x32xf32>
    %59 = arith.mulf %48, %58 : vector<8x32xf32>
    %60 = vector.broadcast %13 : vector<1x32xf32> to vector<8x32xf32>
    %61 = arith.addf %59, %60 : vector<8x32xf32>
    %cst_31 = arith.constant 0.000000e+00 : f32
    %62 = vector.broadcast %cst_31 : f32 to vector<8x32xf32>
    %63 = arith.maximumf %61, %62 : vector<8x32xf32>
    %cst_32 = arith.constant dense<0.000000e+00> : vector<8x16xf32>
    %64 = tpu.matmul %63, %6, %cst_32 {dimension_numbers = #tpu.dot_dimension_numbers<[1], [0], [0], [1], [0, 0, 1, 1], [], []>} : vector<8x32xf32>, vector<32x16xf32>, vector<8x16xf32> -> vector<8x16xf32>
    %65 = vector.broadcast %14 : vector<1x16xf32> to vector<8x16xf32>
    %66 = arith.addf %64, %65 : vector<8x16xf32>
    %67 = vector.extract_strided_slice %66 {offsets = [0, 0], sizes = [8, 8], strides = [1, 1]} : vector<8x16xf32> to vector<8x8xf32>
    %68 = vector.extract_strided_slice %66 {offsets = [0, 8], sizes = [8, 8], strides = [1, 1]} : vector<8x16xf32> to vector<8x8xf32>
    %cst_33 = arith.constant 5.000000e-01 : f32
    %69 = vector.broadcast %cst_33 : f32 to vector<8x8xf32>
    %70 = arith.mulf %69, %68 : vector<8x8xf32>
    %71 = math.exp %70 : vector<8x8xf32>
    %72 = arith.mulf %2, %71 : vector<8x8xf32>
    %73 = arith.addf %67, %72 : vector<8x8xf32>
    %cst_34 = arith.constant dense<0.000000e+00> : vector<8x32xf32>
    %74 = tpu.matmul %73, %7, %cst_34 {dimension_numbers = #tpu.dot_dimension_numbers<[1], [0], [0], [1], [0, 0, 1, 1], [], []>} : vector<8x8xf32>, vector<8x32xf32>, vector<8x32xf32> -> vector<8x32xf32>
    %75 = arith.addf %74, %3 : vector<8x32xf32>
    %cst_35 = arith.constant dense<0.000000e+00> : vector<32xf32>
    %76 = vector.multi_reduction <add>, %75, %cst_35 [0] : vector<8x32xf32> to vector<32xf32>
    %77 = vector.shape_cast %76 : vector<32xf32> to vector<1x32xf32>
    %cst_36 = arith.constant 8.000000e+00 : f32
    %78 = vector.broadcast %cst_36 : f32 to vector<1x32xf32>
    %79 = arith.divf %77, %78 : vector<1x32xf32>
    %80 = vector.broadcast %79 : vector<1x32xf32> to vector<8x32xf32>
    %81 = arith.subf %75, %80 : vector<8x32xf32>
    %82 = arith.mulf %81, %81 : vector<8x32xf32>
    %cst_37 = arith.constant dense<0.000000e+00> : vector<32xf32>
    %83 = vector.multi_reduction <add>, %82, %cst_37 [0] : vector<8x32xf32> to vector<32xf32>
    %84 = vector.shape_cast %83 : vector<32xf32> to vector<1x32xf32>
    %cst_38 = arith.constant 8.000000e+00 : f32
    %85 = vector.broadcast %cst_38 : f32 to vector<1x32xf32>
    %86 = arith.divf %84, %85 : vector<1x32xf32>
    %cst_39 = arith.constant 9.99999974E-6 : f32
    %87 = vector.broadcast %cst_39 : f32 to vector<1x32xf32>
    %88 = arith.addf %86, %87 : vector<1x32xf32>
    %89 = math.rsqrt %88 : vector<1x32xf32>
    %90 = arith.mulf %15, %89 : vector<1x32xf32>
    %91 = vector.broadcast %90 : vector<1x32xf32> to vector<8x32xf32>
    %92 = arith.mulf %81, %91 : vector<8x32xf32>
    %93 = vector.broadcast %16 : vector<1x32xf32> to vector<8x32xf32>
    %94 = arith.addf %92, %93 : vector<8x32xf32>
    %cst_40 = arith.constant 0.000000e+00 : f32
    %95 = vector.broadcast %cst_40 : f32 to vector<8x32xf32>
    %96 = arith.maximumf %94, %95 : vector<8x32xf32>
    %cst_41 = arith.constant dense<0.000000e+00> : vector<8x32xf32>
    %97 = tpu.matmul %96, %8, %cst_41 {dimension_numbers = #tpu.dot_dimension_numbers<[1], [0], [0], [1], [0, 0, 1, 1], [], []>} : vector<8x32xf32>, vector<32x32xf32>, vector<8x32xf32> -> vector<8x32xf32>
    %cst_42 = arith.constant dense<0.000000e+00> : vector<32xf32>
    %98 = vector.multi_reduction <add>, %97, %cst_42 [0] : vector<8x32xf32> to vector<32xf32>
    %99 = vector.shape_cast %98 : vector<32xf32> to vector<1x32xf32>
    %cst_43 = arith.constant 8.000000e+00 : f32
    %100 = vector.broadcast %cst_43 : f32 to vector<1x32xf32>
    %101 = arith.divf %99, %100 : vector<1x32xf32>
    %102 = vector.broadcast %101 : vector<1x32xf32> to vector<8x32xf32>
    %103 = arith.subf %97, %102 : vector<8x32xf32>
    %104 = arith.mulf %103, %103 : vector<8x32xf32>
    %cst_44 = arith.constant dense<0.000000e+00> : vector<32xf32>
    %105 = vector.multi_reduction <add>, %104, %cst_44 [0] : vector<8x32xf32> to vector<32xf32>
    %106 = vector.shape_cast %105 : vector<32xf32> to vector<1x32xf32>
    %cst_45 = arith.constant 8.000000e+00 : f32
    %107 = vector.broadcast %cst_45 : f32 to vector<1x32xf32>
    %108 = arith.divf %106, %107 : vector<1x32xf32>
    %cst_46 = arith.constant 9.99999974E-6 : f32
    %109 = vector.broadcast %cst_46 : f32 to vector<1x32xf32>
    %110 = arith.addf %108, %109 : vector<1x32xf32>
    %111 = math.rsqrt %110 : vector<1x32xf32>
    %112 = arith.mulf %17, %111 : vector<1x32xf32>
    %113 = vector.broadcast %112 : vector<1x32xf32> to vector<8x32xf32>
    %114 = arith.mulf %103, %113 : vector<8x32xf32>
    %115 = vector.broadcast %18 : vector<1x32xf32> to vector<8x32xf32>
    %116 = arith.addf %114, %115 : vector<8x32xf32>
    %cst_47 = arith.constant 0.000000e+00 : f32
    %117 = vector.broadcast %cst_47 : f32 to vector<8x32xf32>
    %118 = arith.maximumf %116, %117 : vector<8x32xf32>
    %cst_48 = arith.constant dense<0.000000e+00> : vector<8x16xf32>
    %119 = tpu.matmul %118, %9, %cst_48 {dimension_numbers = #tpu.dot_dimension_numbers<[1], [0], [0], [1], [0, 0, 1, 1], [], []>} : vector<8x32xf32>, vector<32x16xf32>, vector<8x16xf32> -> vector<8x16xf32>
    %120 = vector.broadcast %19 : vector<1x16xf32> to vector<8x16xf32>
    %121 = arith.addf %119, %120 : vector<8x16xf32>
    %122 = tpu.concatenate %121, %67, %68 in 1 : vector<8x16xf32>, vector<8x8xf32>, vector<8x8xf32> -> vector<8x32xf32>
    %c0_49 = arith.constant 0 : index
    %c0_50 = arith.constant 0 : index
    %123 = vector.load %arg3[%c0_49, %c0_50] : memref<8x32xf32, #tpu.memory_space<vmem>>, vector<8x32xf32>
    tpu.vector_store %arg3[%c0_49, %c0_50], %122 {strides = array<i32>} : memref<8x32xf32, #tpu.memory_space<vmem>>, vector<8x32xf32>,
    return
  }
}

</mosaic_0001>

<llo_original>
// kernel: tpu_custom_call.1
$region0: #{tpu_custom_call.1}
  #allocation0 [shape = 'u32[]', space=smem, size = 0x4, offset = 0x4, fixed_abs, tag = 'smem constant byte address 0x4 - core index']
  #allocation1 [shape = 'u32[72,128]{1,0:T(1,128)}', space=vmem, size = 0x9000, scoped, tag = 'internal scratch']
  %s0 = inlined_call_operand.vmem [shape: f32[8,60], index: 0, kind: input, shape index: {}]
  %s1 = inlined_call_operand.vmem [shape: f32[176,32], index: 1, kind: input, shape index: {}]
  %s2 = inlined_call_operand.vmem [shape: f32[10,32], index: 2, kind: input, shape index: {}]
  %s3 = inlined_call_operand.hbm [shape: f32[8,32], index: 3, kind: output, shape index: {}]
  %s4 = sld [smem:[#allocation0]]
  $region22: #{tpu_custom_call.1} parent=0
    _
  %s6 = ssub.s32 1, %s4
  %s7 = scalar_select 0, %s6, %s4
  $region1: #{tpu_custom_call.1} parent=0
    #allocation2 [shape = 'u8[4096]{0}', space=vmem, size = 0x1000, scoped, tag = 'output window, operand 0, single buffered']
    #allocation3 [shape = 's32[1]{0}', space=sflag, size = 0x4, scoped, tag = 'scoped memory for tpu_custom_call.1']
    %8 = vsyncpa [#allocation3], 0
    // Predicated region
    $region2: #{tpu_custom_call.1} parent=1 // pred_check
      _
    $region3: #{tpu_custom_call.1} parent=1 // pred_check_branch
      %10 = sbr.rel (0) target = $region5
    $region4: #{tpu_custom_call.1} parent=1 // pred_region
      _
    $region5: #{tpu_custom_call.1} parent=1 // pred_fallthru
      _
    // Predicated region
    $region6: #{tpu_custom_call.1} parent=1 // pred_check
      _
    $region7: #{tpu_custom_call.1} parent=1 // pred_check_branch
      %12 = sbr.rel (0) target = $region9
    $region8: #{tpu_custom_call.1} parent=1 // pred_region
      _
    $region9: #{tpu_custom_call.1} parent=1 // pred_fallthru
      _
    // Predicated region
    $region10: #{tpu_custom_call.1} parent=1 // pred_check
      _
    $region11: #{tpu_custom_call.1} parent=1 // pred_check_branch
      %14 = sbr.rel (0) target = $region13
    $region12: #{tpu_custom_call.1} parent=1 // pred_region
      _
    $region13: #{tpu_custom_call.1} parent=1 // pred_fallthru
      _
    %v15 = vld [vmem:[%s0] sm:$0xff]
    %v16 = vld [vmem:[%s1] sm:$0xff]
    %v17 = vld [vmem:[%s1 + $0x8] sm:$0xff]
    %v18 = vld [vmem:[%s1 + $0x10] sm:$0xf]
    %v19 = vld [vmem:[%s1 + $0x20] sm:$0xff]
    %v20 = vld [vmem:[%s1 + $0x28] sm:$0xff]
    %v21 = vld [vmem:[%s1 + $0x30] sm:$0xff]
    %v22 = vld [vmem:[%s1 + $0x38] sm:$0xff]
    %v23 = vld [vmem:[%s1 + $0x40] sm:$0xff]
    %v24 = vld [vmem:[%s1 + $0x48] sm:$0xff]
    %v25 = vld [vmem:[%s1 + $0x50] sm:$0xff]
    %v26 = vld [vmem:[%s1 + $0x58] sm:$0xff]
    %v27 = vld [vmem:[%s1 + $0x60] sm:$0xff]
    %v28 = vld [vmem:[%s1 + $0x70] sm:$0xff]
    %v29 = vld [vmem:[%s1 + $0x78] sm:$0xff]
    %v30 = vld [vmem:[%s1 + $0x80] sm:$0xff]
    %v31 = vld [vmem:[%s1 + $0x88] sm:$0xff]
    %v32 = vld [vmem:[%s1 + $0x90] sm:$0xff]
    %v33 = vld [vmem:[%s1 + $0x98] sm:$0xff]
    %v34 = vld [vmem:[%s1 + $0xa0] sm:$0xff]
    %v35 = vld [vmem:[%s1 + $0xa8] sm:$0xff]
    %v36 = vld [vmem:[%s2] sm:$0x1]
    %v37 = vld [vmem:[%s2 + $0x1] sm:$0x1]
    %v38 = vld [vmem:[%s2 + $0x2] sm:$0x1]
    %v39 = vld [vmem:[%s2 + $0x3] sm:$0x1]
    %v40 = vld [vmem:[%s2 + $0x4] sm:$0x1]
    %v41 = vld [vmem:[%s2 + $0x5] sm:$0x1]
    %v42 = vld [vmem:[%s2 + $0x6] sm:$0x1]
    %v43 = vld [vmem:[%s2 + $0x7] sm:$0x1]
    %v44 = vld [vmem:[%s2 + $0x8] sm:$0x1]
    %v45 = vld [vmem:[%s2 + $0x9] sm:$0x1]
    %vm46 = vcmask 162816
    %v48 = vsel %vm46, %v15, 0
    %vm50 = vcmask 1043456
    %v52 = vsel %vm50, %v18, 0
    %54 = vmatpush.msra.mxu0 0.0
    %55 = vmatpush.msra.mxu0 0.0
    %56 = vmatpush.msra.mxu0 0.0
    %57 = vmatpush.msra.mxu0 0.0
    %58 = vmatpush.msra.mxu0 0.0
    %59 = vmatpush.msra.mxu0 0.0
    %60 = vmatpush.msra.mxu0 0.0
    %61 = vmatpush.msra.mxu0 0.0
    %62 = vmatpush.msra.mxu0 0.0
    %63 = vmatpush.msra.mxu0 0.0
    %64 = vmatpush.msra.mxu0 0.0
    %65 = vmatpush.msra.mxu0 0.0
    %66 = vmatpush.msra.mxu0 0.0
    %67 = vmatpush.msra.mxu0 %v52
    %68 = vmatpush.msra.mxu0 %v17
    %69 = vmatpush.msra.mxu0 %v16
    %70 = vmatmul.f32.gmra.mxu0 %v48
    %v71 = vpop.f32.mrf.mxu0
    %v72 = vadd.f32 0.0, %v71
    %73 = vdwg.mxu0
    %vm74 = vcmask 261120
    %v75 = vsel %vm74, %v72, 0.0
    %v76 = vrot.slane %v75, 4
    %v77 = vadd.f32 %v75, %v76
    %v78 = vrot.slane %v77, 2
    %v79 = vadd.f32 %v77, %v78
    %v80 = vrot.slane %v79, 1
    %v81 = vadd.f32 %v79, %v80
    %v82 = vrcp.pop 8.0
    %v83 = vmul.f32 8.0, %v82
    %v84 = vsub.f32 1.0, %v83
    %v85 = vmul.f32 %v82, %v84
    %v86 = vadd.f32 %v82, %v85
    %vm87 = vweird.f32 %v82
    %v88 = vsel %vm87, %v82, %v86
    %v89 = vmul.f32 %v81, %v88
    %v90 = vsub.f32 %v72, %v89
    %v91 = vmul.f32 %v90, %v90
    %v92 = vsel %vm74, %v91, 0.0
    %v93 = vrot.slane %v92, 4
    %v94 = vadd.f32 %v92, %v93
    %v95 = vrot.slane %v94, 2
    %v96 = vadd.f32 %v94, %v95
    %v97 = vrot.slane %v96, 1
    %v98 = vadd.f32 %v96, %v97
    %v99 = vmul.f32 %v98, %v88
    %v100 = vadd.f32 %v99, 1e-05
    %v101 = vrsqrt.pop %v100
    %v102 = vmul.f32 %v101, %v100
    %v103 = vmul.f32 %v102, %v101
    %v104 = vmul.f32 0.5, %v103
    %v105 = vsub.f32 1.5, %v104
    %v106 = vmul.f32 %v101, %v105
    %vm107 = vweird.f32 %v100
    %vm108 = vweird.f32 %v101
    %vm109 = vmor %vm107, %vm108
    %v110 = vsel %vm109, %v101, %v106
    %v111 = vmul.f32 %v36, %v110
    %v112 = vperm.slane %v111, 0
    %v113 = vmul.f32 %v90, %v112
    %v114 = vperm.slane %v37, 0
    %v115 = vadd.f32 %v113, %v114
    %v116 = vmax.f32 %v115, 0.0
    %v118 = vsel %vm74, %v116, 0
    %120 = vmatpush.msra.mxu0 0.0
    %121 = vmatpush.msra.mxu0 0.0
    %122 = vmatpush.msra.mxu0 0.0
    %123 = vmatpush.msra.mxu0 0.0
    %124 = vmatpush.msra.mxu0 0.0
    %125 = vmatpush.msra.mxu0 0.0
    %126 = vmatpush.msra.mxu0 0.0
    %127 = vmatpush.msra.mxu0 0.0
    %128 = vmatpush.msra.mxu0 0.0
    %129 = vmatpush.msra.mxu0 0.0
    %130 = vmatpush.msra.mxu0 0.0
    %131 = vmatpush.msra.mxu0 0.0
    %132 = vmatpush.msra.mxu0 %v22
    %133 = vmatpush.msra.mxu0 %v21
    %134 = vmatpush.msra.mxu0 %v20
    %135 = vmatpush.msra.mxu0 %v19
    %136 = vmatmul.f32.gmra.mxu0 %v118
    %v137 = vpop.f32.mrf.mxu0
    %v138 = vadd.f32 0.0, %v137
    %139 = vdwg.mxu0
    %v140 = vsel %vm74, %v138, 0.0
    %v141 = vrot.slane %v140, 4
    %v142 = vadd.f32 %v140, %v141
    %v143 = vrot.slane %v142, 2
    %v144 = vadd.f32 %v142, %v143
    %v145 = vrot.slane %v144, 1
    %v146 = vadd.f32 %v144, %v145
    %v147 = vmul.f32 %v146, %v88
    %v148 = vsub.f32 %v138, %v147
    %v149 = vmul.f32 %v148, %v148
    %v150 = vsel %vm74, %v149, 0.0
    %v151 = vrot.slane %v150, 4
    %v152 = vadd.f32 %v150, %v151
    %v153 = vrot.slane %v152, 2
    %v154 = vadd.f32 %v152, %v153
    %v155 = vrot.slane %v154, 1
    %v156 = vadd.f32 %v154, %v155
    %v157 = vmul.f32 %v156, %v88
    %v158 = vadd.f32 %v157, 1e-05
    %v159 = vrsqrt.pop %v158
    %v160 = vmul.f32 %v159, %v158
    %v161 = vmul.f32 %v160, %v159
    %v162 = vmul.f32 0.5, %v161
    %v163 = vsub.f32 1.5, %v162
    %v164 = vmul.f32 %v159, %v163
    %vm165 = vweird.f32 %v158
    %vm166 = vweird.f32 %v159
    %vm167 = vmor %vm165, %vm166
    %v168 = vsel %vm167, %v159, %v164
    %v169 = vmul.f32 %v38, %v168
    %v170 = vperm.slane %v169, 0
    %v171 = vmul.f32 %v148, %v170
    %v172 = vperm.slane %v39, 0
    %v173 = vadd.f32 %v171, %v172
    %v174 = vmax.f32 %v173, 0.0
    %v175 = vperm.slane %v40, 0
    %v177 = vsel %vm74, %v174, 0
    %179 = vmatpush.msra.mxu0 0.0
    %180 = vmatpush.msra.mxu0 0.0
    %181 = vmatpush.msra.mxu0 0.0
    %182 = vmatpush.msra.mxu0 0.0
    %183 = vmatpush.msra.mxu0 0.0
    %184 = vmatpush.msra.mxu0 0.0
    %185 = vmatpush.msra.mxu0 0.0
    %186 = vmatpush.msra.mxu0 0.0
    %187 = vmatpush.msra.mxu0 0.0
    %188 = vmatpush.msra.mxu0 0.0
    %189 = vmatpush.msra.mxu0 0.0
    %190 = vmatpush.msra.mxu0 0.0
    %191 = vmatpush.msra.mxu0 %v26
    %192 = vmatpush.msra.mxu0 %v25
    %193 = vmatpush.msra.mxu0 %v24
    %194 = vmatpush.msra.mxu0 %v23
    %195 = vmatmul.f32.gmra.mxu0 %v177
    %v196 = vpop.f32.mrf.mxu0
    %v197 = vadd.f32 %v175, %v196
    %198 = vdwg.mxu0
    %v199 = vmul.f32 %v197, 0.5
    %v200 = vmul.f32 %v199, 1.442695
    %v201 = vpow.pop %v200
    %203 = vrot.lane.b32.xlu0 %v201, 12
    %v204 = vpop.permute.xlu0 %203
    %v206 = vmul.f32 %v15, %v204
    %208 = vrot.lane.b32.xlu0 %v206, 108
    %v209 = vpop.permute.xlu0 %208
    %v211 = vadd.f32 %v197, %v209
    %212 = vrot.lane.b32.xlu0 %v15, 100
    %v213 = vpop.permute.xlu0 %212
    %vm215 = vcmask 64512
    %v217 = vsel %vm215, %v211, 0
    %219 = vmatpush.msra.mxu0 0.0
    %220 = vmatpush.msra.mxu0 0.0
    %221 = vmatpush.msra.mxu0 0.0
    %222 = vmatpush.msra.mxu0 0.0
    %223 = vmatpush.msra.mxu0 0.0
    %224 = vmatpush.msra.mxu0 0.0
    %225 = vmatpush.msra.mxu0 0.0
    %226 = vmatpush.msra.mxu0 0.0
    %227 = vmatpush.msra.mxu0 0.0
    %228 = vmatpush.msra.mxu0 0.0
    %229 = vmatpush.msra.mxu0 0.0
    %230 = vmatpush.msra.mxu0 0.0
    %231 = vmatpush.msra.mxu0 0.0
    %232 = vmatpush.msra.mxu0 0.0
    %233 = vmatpush.msra.mxu0 0.0
    %234 = vmatpush.msra.mxu0 %v27
    %235 = vmatmul.f32.gmra.mxu0 %v217
    %v236 = vpop.f32.mrf.mxu0
    %v237 = vadd.f32 %v213, %v236
    %238 = vdwg.mxu0
    %v239 = vsel %vm74, %v237, 0.0
    %v240 = vrot.slane %v239, 4
    %v241 = vadd.f32 %v239, %v240
    %v242 = vrot.slane %v241, 2
    %v243 = vadd.f32 %v241, %v242
    %v244 = vrot.slane %v243, 1
    %v245 = vadd.f32 %v243, %v244
    %v246 = vmul.f32 %v245, %v88
    %v247 = vsub.f32 %v237, %v246
    %v248 = vmul.f32 %v247, %v247
    %v249 = vsel %vm74, %v248, 0.0
    %v250 = vrot.slane %v249, 4
    %v251 = vadd.f32 %v249, %v250
    %v252 = vrot.slane %v251, 2
    %v253 = vadd.f32 %v251, %v252
    %v254 = vrot.slane %v253, 1
    %v255 = vadd.f32 %v253, %v254
    %v256 = vmul.f32 %v255, %v88
    %v257 = vadd.f32 %v256, 1e-05
    %v258 = vrsqrt.pop %v257
    %v259 = vmul.f32 %v258, %v257
    %v260 = vmul.f32 %v259, %v258
    %v261 = vmul.f32 0.5, %v260
    %v262 = vsub.f32 1.5, %v261
    %v263 = vmul.f32 %v258, %v262
    %vm264 = vweird.f32 %v257
    %vm265 = vweird.f32 %v258
    %vm266 = vmor %vm264, %vm265
    %v267 = vsel %vm266, %v258, %v263
    %v268 = vmul.f32 %v41, %v267
    %v269 = vperm.slane %v268, 0
    %v270 = vmul.f32 %v247, %v269
    %v271 = vperm.slane %v42, 0
    %v272 = vadd.f32 %v270, %v271
    %v273 = vmax.f32 %v272, 0.0
    %v275 = vsel %vm74, %v273, 0
    %277 = vmatpush.msra.mxu0 0.0
    %278 = vmatpush.msra.mxu0 0.0
    %279 = vmatpush.msra.mxu0 0.0
    %280 = vmatpush.msra.mxu0 0.0
    %281 = vmatpush.msra.mxu0 0.0
    %282 = vmatpush.msra.mxu0 0.0
    %283 = vmatpush.msra.mxu0 0.0
    %284 = vmatpush.msra.mxu0 0.0
    %285 = vmatpush.msra.mxu0 0.0
    %286 = vmatpush.msra.mxu0 0.0
    %287 = vmatpush.msra.mxu0 0.0
    %288 = vmatpush.msra.mxu0 0.0
    %289 = vmatpush.msra.mxu0 %v31
    %290 = vmatpush.msra.mxu0 %v30
    %291 = vmatpush.msra.mxu0 %v29
    %292 = vmatpush.msra.mxu0 %v28
    %293 = vmatmul.f32.gmra.mxu0 %v275
    %v294 = vpop.f32.mrf.mxu0
    %v295 = vadd.f32 0.0, %v294
    %296 = vdwg.mxu0
    %v297 = vsel %vm74, %v295, 0.0
    %v298 = vrot.slane %v297, 4
    %v299 = vadd.f32 %v297, %v298
    %v300 = vrot.slane %v299, 2
    %v301 = vadd.f32 %v299, %v300
    %v302 = vrot.slane %v301, 1
    %v303 = vadd.f32 %v301, %v302
    %v304 = vmul.f32 %v303, %v88
    %v305 = vsub.f32 %v295, %v304
    %v306 = vmul.f32 %v305, %v305
    %v307 = vsel %vm74, %v306, 0.0
    %v308 = vrot.slane %v307, 4
    %v309 = vadd.f32 %v307, %v308
    %v310 = vrot.slane %v309, 2
    %v311 = vadd.f32 %v309, %v310
    %v312 = vrot.slane %v311, 1
    %v313 = vadd.f32 %v311, %v312
    %v314 = vmul.f32 %v313, %v88
    %v315 = vadd.f32 %v314, 1e-05
    %v316 = vrsqrt.pop %v315
    %v317 = vmul.f32 %v316, %v315
    %v318 = vmul.f32 %v317, %v316
    %v319 = vmul.f32 0.5, %v318
    %v320 = vsub.f32 1.5, %v319
    %v321 = vmul.f32 %v316, %v320
    %vm322 = vweird.f32 %v315
    %vm323 = vweird.f32 %v316
    %vm324 = vmor %vm322, %vm323
    %v325 = vsel %vm324, %v316, %v321
    %v326 = vmul.f32 %v43, %v325
    %v327 = vperm.slane %v326, 0
    %v328 = vmul.f32 %v305, %v327
    %v329 = vperm.slane %v44, 0
    %v330 = vadd.f32 %v328, %v329
    %v331 = vmax.f32 %v330, 0.0
    %v332 = vperm.slane %v45, 0
    %v334 = vsel %vm74, %v331, 0
    %336 = vmatpush.msra.mxu0 0.0
    %337 = vmatpush.msra.mxu0 0.0
    %338 = vmatpush.msra.mxu0 0.0
    %339 = vmatpush.msra.mxu0 0.0
    %340 = vmatpush.msra.mxu0 0.0
    %341 = vmatpush.msra.mxu0 0.0
    %342 = vmatpush.msra.mxu0 0.0
    %343 = vmatpush.msra.mxu0 0.0
    %344 = vmatpush.msra.mxu0 0.0
    %345 = vmatpush.msra.mxu0 0.0
    %346 = vmatpush.msra.mxu0 0.0
    %347 = vmatpush.msra.mxu0 0.0
    %348 = vmatpush.msra.mxu0 %v35
    %349 = vmatpush.msra.mxu0 %v34
    %350 = vmatpush.msra.mxu0 %v33
    %351 = vmatpush.msra.mxu0 %v32
    %352 = vmatmul.f32.gmra.mxu0 %v334
    %v353 = vpop.f32.mrf.mxu0
    %v354 = vadd.f32 %v332, %v353
    %355 = vdwg.mxu0
    %357 = vrot.lane.b32.xlu0 %v197, 16
    %v358 = vpop.permute.xlu0 %357
    %vm360 = vcmask 130048
    %v361 = vsel %vm360, %v354, %v358
    %vm362 = vcmask 195584
    %v363 = vsel %vm362, %v361, %v358
    %364 = vst.msk [vmem:[#allocation2] sm:$0xff] %vm74, %v363
    // Predicated region
    $region14: #{tpu_custom_call.1} parent=1 // pred_check
      _
    $region15: #{tpu_custom_call.1} parent=1 // pred_check_branch
      %366 = sbr.rel (0) target = $region17
    $region16: #{tpu_custom_call.1} parent=1 // pred_region
      %368 = vsyncadd [#allocation3], 0
      %s370 = sshll.u32 [#allocation2], 4
      %s371 = int_to_ptr.vmem [resolvable:$true] %s370
      %s372 = sshll.u32 %s3, 4
      %s373 = int_to_ptr.hbm [resolvable:$true] %s372
      %375 = dma.vmem_to_hbm [thread:$0]  %s371, 128, %s373, [#allocation3]
    $region17: #{tpu_custom_call.1} parent=1 // pred_fallthru
      _
    // Predicated region
    $region18: #{tpu_custom_call.1} parent=1 // pred_check
      _
    $region19: #{tpu_custom_call.1} parent=1 // pred_check_branch
      %377 = sbr.rel (0) target = $region21
    $region20: #{tpu_custom_call.1} parent=1 // pred_region
      %379 = dma.done [#allocation3], 128
    $region21: #{tpu_custom_call.1} parent=1 // pred_fallthru
      _
    %380 = vsyncpa [#allocation3], 1

</llo_original>
